<compile_context>
chip_gen: v7x
topology: tpu7x:2x2x1
jax: 0.10.0
libtpu: 0.0.40
codegen_flags: <defaults>
</compile_context>

<pallas_src>
import functools

import jax
import jax.numpy as jnp
from jax.experimental import pallas as pl
from jax.experimental.pallas import tpu as pltpu

_LANE = 128
_NEG_PAD = -1e30  # finite "-inf" for padded class lanes: exp(pad - max) == 0 exactly


def _round_up(x, m):
    return ((x + m - 1) // m) * m


def _cdiv(a, b):
    return -(-a // b)


def _tpu_config():
    """(vmem_limit_bytes, vmem_budget_bytes, num_tensorcores) with safe fallbacks."""
    vmem_phys = 64 << 20          # conservative default = v7x per-TC VMEM
    num_cores = 1
    try:
        info = pltpu.get_tpu_info()
        vmem_phys = int(getattr(info, "vmem_capacity_bytes", vmem_phys))
        for attr in ("num_cores", "core_count", "num_tensorcores",
                     "tensor_cores_per_chip", "num_tensor_cores"):
            val = getattr(info, attr, None)
            if val:
                num_cores = int(val)
                break
    except Exception:
        pass
    try:
        dev = jax.devices()[0]
        for attr in ("num_cores", "core_count"):
            val = getattr(dev, attr, None)
            if val:
                num_cores = max(num_cores, int(val))
                break
    except Exception:
        pass
    vmem_limit = max(32 << 20, (vmem_phys * 3) // 4)   # 48 MiB on v7x, 96 MiB on v5e/v6e
    vmem_budget = max(16 << 20, vmem_limit - (12 << 20))
    return vmem_limit, vmem_budget, num_cores


# ---------------------------------------------------------------------------
# kernels
# ---------------------------------------------------------------------------
def _linear_logsoftmax_kernel(*refs, n_classes):
    """refs = (x_0..x_{k-1}, w_0..w_{k-1}, b, o); logits = sum_i x_i @ w_i + b."""
    *xw_refs, b_ref, o_ref = refs
    n = len(xw_refs) // 2
    acc = None
    for x_ref, w_ref in zip(xw_refs[:n], xw_refs[n:]):
        part = jnp.dot(x_ref[...], w_ref[...], preferred_element_type=jnp.float32)
        acc = part if acc is None else acc + part
    logits = acc + b_ref[...]                          # (tile_b, n_pad) + (1, n_pad)
    # numerically stable log_softmax over the (padded) class lanes
    m = jnp.max(logits, axis=-1, keepdims=True)
    shifted = logits - m
    lse = jnp.log(jnp.sum(jnp.exp(shifted), axis=-1, keepdims=True))
    # store only the real classes: full-last-dim (tile_b, n_classes) output block
    o_ref[...] = (shifted - lse)[:, :n_classes].astype(o_ref.dtype)


def _linear_logsoftmax_ktiled_kernel(x_ref, w_ref, b_ref, o_ref, acc_ref, *, n_classes):
    """K-tiled fallback: accumulate partial matmuls, finalize on the last K step."""
    k = pl.program_id(1)

    @pl.when(k == 0)
    def _():
        acc_ref[...] = jnp.zeros_like(acc_ref)

    acc_ref[...] += jnp.dot(x_ref[...], w_ref[...], preferred_element_type=jnp.float32)

    @pl.when(k == pl.num_programs(1) - 1)
    def _():
        logits = acc_ref[...] + b_ref[...]
        m = jnp.max(logits, axis=-1, keepdims=True)
        shifted = logits - m
        lse = jnp.log(jnp.sum(jnp.exp(shifted), axis=-1, keepdims=True))
        o_ref[...] = (shifted - lse)[:, :n_classes].astype(o_ref.dtype)


# ---------------------------------------------------------------------------
# tile sizing
# ---------------------------------------------------------------------------
def _pick_tile_b(batch, feat_dims, itemsizes, n_classes, n_pad, vmem_budget, num_cores):
    """Largest batch tile that keeps the pipelined buffers inside the VMEM budget."""
    in_size = sum(feat_dims)
    sublane = 16 if max(itemsizes) <= 2 else 8          # bf16 packs 16 rows / vreg
    weight_vmem = 4 * (in_size * n_pad + n_pad)         # single-buffered residents
    row_bytes = (2 * sum(f * s for f, s in zip(feat_dims, itemsizes))   # 2x-buffered feats
                 + 2 * 4 * n_classes)                                   # 2x-buffered output
    budget = max(2 << 20, vmem_budget - weight_vmem)
    cap = min(1024, budget // max(row_bytes, 1))
    cap = max(sublane, (cap // sublane) * sublane)
    if batch <= cap:
        if num_cores >= 2 and batch > sublane:
            # always give a 2-TC chip two grid steps to shard across cores
            return min(batch, _round_up(_cdiv(batch, 2), sublane))
        return batch                                    # 1-TC chip: one block, no overhead
    return cap


def _pick_k_tiled_sizes(batch, itemsize, n_classes, n_pad, vmem_budget, num_cores, k_tile):
    if k_tile is None:
        k_budget = max(1 << 20, vmem_budget // 4)
        k_tile = (k_budget // (2 * 4 * n_pad)) // _LANE * _LANE
        k_tile = max(_LANE, min(2048, k_tile))
    sublane = 16 if itemsize <= 2 else 8
    weight_vmem = 2 * 4 * (k_tile * n_pad + n_pad)      # double-buffered K-slabs of W
    row_bytes = 2 * k_tile * itemsize + 4 * n_pad + 2 * 4 * n_classes
    budget = max(2 << 20, vmem_budget - weight_vmem)
    cap = min(1024, budget // max(row_bytes, 1))
    cap = max(sublane, (cap // sublane) * sublane)
    if batch <= cap:
        tile_b = batch
        if num_cores >= 2 and batch > sublane:
            tile_b = min(batch, _round_up(_cdiv(batch, 2), sublane))
    else:
        tile_b = cap
    return tile_b, k_tile


# ---------------------------------------------------------------------------
# pallas_call wrappers
# ---------------------------------------------------------------------------
def _streaming_call(feats, w_parts, b_pad, *, n_classes, n_pad, tile_b,
                    vmem_limit, single_buffer_weights):
    B = int(feats[0].shape[0])
    feat_dims = [int(f.shape[-1]) for f in feats]
    in_size = sum(feat_dims)
    grid = (_cdiv(B, tile_b),)

    const_kw = {"pipeline_mode": pl.Buffered(1)} if single_buffer_weights else {}
    feat_specs = [pl.BlockSpec((tile_b, f), lambda i: (i, 0)) for f in feat_dims]
    w_specs = [pl.BlockSpec((f, n_pad), lambda i: (0, 0), **const_kw) for f in feat_dims]
    b_spec = pl.BlockSpec((1, n_pad), lambda i: (0, 0), **const_kw)
    out_spec = pl.BlockSpec((tile_b, n_classes), lambda i: (i, 0))

    feat_bytes = sum(B * f * x.dtype.itemsize for f, x in zip(feat_dims, feats))
    cost = pl.CostEstimate(
        flops=2 * B * in_size * n_pad,
        transcendentals=B * n_pad,
        bytes_accessed=int(feat_bytes + 4 * (in_size * n_pad + n_pad + B * n_classes)),
    )

    kernel = functools.partial(_linear_logsoftmax_kernel, n_classes=n_classes)
    return pl.pallas_call(
        kernel,
        out_shape=jax.ShapeDtypeStruct((B, n_classes), jnp.float32),
        grid=grid,
        in_specs=feat_specs + w_specs + [b_spec],
        out_specs=out_spec,
        compiler_params=pltpu.CompilerParams(
            dimension_semantics=("parallel",),
            vmem_limit_bytes=int(vmem_limit),
        ),
        cost_estimate=cost,
    )(*feats, *w_parts, b_pad)


def _k_tiled_call(x_cat, w_pad, b_pad, *, n_classes, n_pad, tile_b, tile_k, vmem_limit):
    B, k_total = int(x_cat.shape[0]), int(x_cat.shape[1])
    grid = (_cdiv(B, tile_b), k_total // tile_k)
    cost = pl.CostEstimate(
        flops=2 * B * k_total * n_pad,
        transcendentals=B * n_pad,
        bytes_accessed=int(B * k_total * x_cat.dtype.itemsize
                           + 4 * (k_total * n_pad + n_pad + B * n_classes)),
    )
    kernel = functools.partial(_linear_logsoftmax_ktiled_kernel, n_classes=n_classes)
    return pl.pallas_call(
        kernel,
        out_shape=jax.ShapeDtypeStruct((B, n_classes), jnp.float32),
        grid=grid,
        in_specs=[pl.BlockSpec((tile_b, tile_k), lambda i, k: (i, k)),
                  pl.BlockSpec((tile_k, n_pad), lambda i, k: (k, 0)),
                  pl.BlockSpec((1, n_pad), lambda i, k: (0, 0))],
        out_specs=pl.BlockSpec((tile_b, n_classes), lambda i, k: (i, 0)),
        scratch_shapes=[pltpu.VMEM((tile_b, n_pad), jnp.float32)],
        compiler_params=pltpu.CompilerParams(
            dimension_semantics=("parallel", "arbitrary"),
            vmem_limit_bytes=int(vmem_limit),
        ),
        cost_estimate=cost,
    )(x_cat, w_pad, b_pad)


# ---------------------------------------------------------------------------
# user-facing API
# ---------------------------------------------------------------------------
class MeanPoolClassifierPallas:
    """Prepared-parameter forward of MeanPoolClassifier (linear + log_softmax).

    Weight prep (transpose, lane-pad to a multiple of 128 classes, split per
    feature chunk) runs once at construction, not per call.
    """

    def __init__(self, weight, bias, feat_dims=None, feature_dtype=None):
        weight = jnp.asarray(weight, jnp.float32)     # (n_classes, in_size) nn.Linear layout
        bias = jnp.asarray(bias, jnp.float32)
        self.n_classes, self.in_size = int(weight.shape[0]), int(weight.shape[1])
        self.n_pad = _round_up(max(self.n_classes, _LANE), _LANE)
        # Optional bf16 feature path (halves HBM feature traffic); default keeps
        # the caller's dtype so numerics match the PyTorch module exactly.
        self.feature_dtype = feature_dtype
        # lane-dense class dim: zero weight columns, large-negative bias on pad lanes
        self.w_full = (jnp.zeros((self.in_size, self.n_pad), jnp.float32)
                       .at[:, :self.n_classes].set(weight.T))
        self.b_pad = (jnp.full((1, self.n_pad), _NEG_PAD, jnp.float32)
                      .at[0, :self.n_classes].set(bias))
        self._w_parts = {}
        if feat_dims is not None:
            self._split(tuple(int(f) for f in feat_dims))

    def _split(self, feat_dims):
        if feat_dims not in self._w_parts:
            parts, off = [], 0
            for f in feat_dims:
                parts.append(self.w_full[off:off + f, :])
                off += f
            assert off == self.in_size, "feature dims must sum to in_size"
            self._w_parts[feat_dims] = parts
        return self._w_parts[feat_dims]

    def __call__(self, tensor_0, tensor_1=None, *, tile_b=None,
                 force_k_tiling=False, k_tile=None):
        feats = [tensor_0] if tensor_1 is None else [tensor_0, tensor_1]
        if self.feature_dtype is not None:
            feats = [f.astype(self.feature_dtype) for f in feats]
        feat_dims = tuple(int(f.shape[-1]) for f in feats)
        itemsizes = [f.dtype.itemsize for f in feats]
        B = int(feats[0].shape[0])
        vmem_limit, vmem_budget, num_cores = _tpu_config()

        resident_w = 4 * (self.in_size * self.n_pad + self.n_pad)
        if force_k_tiling or resident_w > vmem_budget // 2:
            # K-tiling fallback: the weight is too large to keep VMEM-resident at once.
            tb, tk = _pick_k_tiled_sizes(B, max(itemsizes), self.n_classes, self.n_pad,
                                         vmem_budget, num_cores, k_tile)
            if tile_b is not None:
                tb = tile_b
            k_pad = _round_up(self.in_size, tk)
            x_cat = feats[0] if len(feats) == 1 else jnp.concatenate(feats, axis=-1)
            if k_pad > self.in_size:
                x_cat = jnp.pad(x_cat, ((0, 0), (0, k_pad - self.in_size)))
                w_k = jnp.pad(self.w_full, ((0, k_pad - self.in_size), (0, 0)))
            else:
                w_k = self.w_full
            return _k_tiled_call(x_cat, w_k, self.b_pad,
                                 n_classes=self.n_classes, n_pad=self.n_pad,
                                 tile_b=tb, tile_k=tk, vmem_limit=vmem_limit)

        # main streaming path: features cross HBM exactly once, no concat
        w_parts = self._split(feat_dims)
        if tile_b is None:
            tile_b = _pick_tile_b(B, feat_dims, itemsizes, self.n_classes, self.n_pad,
                                  vmem_budget, num_cores)
        kwargs = dict(n_classes=self.n_classes, n_pad=self.n_pad, tile_b=tile_b,
                      vmem_limit=vmem_limit)
        try:
            return _streaming_call(feats, w_parts, self.b_pad,
                                   single_buffer_weights=True, **kwargs)
        except Exception:
            # fallback if this jax build rejects pipeline_mode=pl.Buffered(1)
            return _streaming_call(feats, w_parts, self.b_pad,
                                   single_buffer_weights=False, **kwargs)


def mean_pool_classifier(tensor_0, tensor_1, weight, bias, **kwargs):
    """One-shot convenience wrapper; for repeated calls build MeanPoolClassifierPallas once."""
    feat_dims = None if tensor_1 is None else (tensor_0.shape[-1], tensor_1.shape[-1])
    clf = MeanPoolClassifierPallas(weight, bias, feat_dims=feat_dims)
    return clf(tensor_0, tensor_1, **kwargs)


def _reference(tensor_0, tensor_1, weight, bias):
    feats = tensor_0 if tensor_1 is None else jnp.concatenate((tensor_0, tensor_1), -1)
    logits = feats @ weight.T + bias
    return jax.nn.log_softmax(logits, axis=-1)


if __name__ == "__main__":
    key = jax.random.PRNGKey(0)
    k0, k1, kw, kb = jax.random.split(key, 4)

    in_size = 256
    n_classes = 2
    batch = 8

    # Two feature chunks the module would concatenate along the last dim.
    tensor_0 = jax.random.normal(k0, (batch, in_size // 2), dtype=jnp.float32)
    tensor_1 = jax.random.normal(k1, (batch, in_size // 2), dtype=jnp.float32)

    # Deterministic PyTorch-style nn.Linear init: U(-1/sqrt(in), 1/sqrt(in)).
    bound = 1.0 / (in_size ** 0.5)
    weight = jax.random.uniform(kw, (n_classes, in_size), jnp.float32, -bound, bound)
    bias = jax.random.uniform(kb, (n_classes,), jnp.float32, -bound, bound)

    ref = _reference(tensor_0, tensor_1, weight, bias)

    # prepared-parameter path (weight prep hoisted out of the per-call path)
    clf = MeanPoolClassifierPallas(weight, bias, feat_dims=(in_size // 2, in_size // 2))

    # two-input path (torch.cat branch)
    out2 = jax.block_until_ready(clf(tensor_0, tensor_1))
    assert out2.shape == (batch, n_classes)
    assert jnp.allclose(out2, ref, atol=1e-5, rtol=1e-5), "mismatch vs reference (2-input)"

    # single-input path (tensor_1 is None)
    feats_full = jnp.concatenate((tensor_0, tensor_1), axis=-1)
    out1 = jax.block_until_ready(clf(feats_full, None))
    assert jnp.allclose(out1, ref, atol=1e-5, rtol=1e-5), "mismatch vs reference (1-input)"

    # one-shot convenience wrapper
    out3 = jax.block_until_ready(mean_pool_classifier(tensor_0, tensor_1, weight, bias))
    assert jnp.allclose(out3, ref, atol=1e-5, rtol=1e-5), "mismatch vs reference (wrapper)"

    # K-tiling fallback path, forced with a small K tile so it is exercised here
    out4 = jax.block_until_ready(clf(tensor_0, tensor_1, force_k_tiling=True, k_tile=128))
    assert jnp.allclose(out4, ref, atol=1e-5, rtol=1e-5), "mismatch vs reference (K-tiled)"

    print("KERNEL_OK")
</pallas_src>

<mosaic_0001>
module attributes {stable_mosaic.version = 11 : i64} {
  func.func @_linear_logsoftmax_kernel(%arg0: i32, %arg1: memref<8x128xf32, #tpu.memory_space<vmem>>, %arg2: memref<8x128xf32, #tpu.memory_space<vmem>>, %arg3: memref<128x128xf32, #tpu.memory_space<vmem>>, %arg4: memref<128x128xf32, #tpu.memory_space<vmem>>, %arg5: memref<1x128xf32, #tpu.memory_space<vmem>>, %arg6: memref<8x2xf32, #tpu.memory_space<vmem>>) attributes {dimension_semantics = [#tpu.dimension_semantics<parallel>], iteration_bounds = array<i64: 1>, scalar_prefetch = 0 : i64, scratch_operands = 0 : i64, tpu.core_type = #tpu.core_type<tc>, window_params = [{transform_indices = @transform_0, window_bounds = array<i64: 8, 128>}, {transform_indices = @transform_1, window_bounds = array<i64: 8, 128>}, {pipeline_mode = #tpu.pipeline_mode<synchronous>, transform_indices = @transform_2, window_bounds = array<i64: 128, 128>}, {pipeline_mode = #tpu.pipeline_mode<synchronous>, transform_indices = @transform_3, window_bounds = array<i64: 128, 128>}, {pipeline_mode = #tpu.pipeline_mode<synchronous>, transform_indices = @transform_4, window_bounds = array<i64: 1, 128>}, {transform_indices = @transform_5, window_bounds = array<i64: 8, 2>}]} {
    %c0 = arith.constant 0 : index
    %c0_0 = arith.constant 0 : index
    %0 = vector.load %arg1[%c0, %c0_0] : memref<8x128xf32, #tpu.memory_space<vmem>>, vector<8x128xf32>
    %c0_1 = arith.constant 0 : index
    %c0_2 = arith.constant 0 : index
    %1 = vector.load %arg3[%c0_1, %c0_2] : memref<128x128xf32, #tpu.memory_space<vmem>>, vector<128x128xf32>
    %cst = arith.constant dense<0.000000e+00> : vector<8x128xf32>
    %2 = tpu.matmul %0, %1, %cst {dimension_numbers = #tpu.dot_dimension_numbers<[1], [0], [0], [1], [0, 0, 1, 1], [], []>} : vector<8x128xf32>, vector<128x128xf32>, vector<8x128xf32> -> vector<8x128xf32>
    %c0_3 = arith.constant 0 : index
    %c0_4 = arith.constant 0 : index
    %3 = vector.load %arg2[%c0_3, %c0_4] : memref<8x128xf32, #tpu.memory_space<vmem>>, vector<8x128xf32>
    %c0_5 = arith.constant 0 : index
    %c0_6 = arith.constant 0 : index
    %4 = vector.load %arg4[%c0_5, %c0_6] : memref<128x128xf32, #tpu.memory_space<vmem>>, vector<128x128xf32>
    %cst_7 = arith.constant dense<0.000000e+00> : vector<8x128xf32>
    %5 = tpu.matmul %3, %4, %cst_7 {dimension_numbers = #tpu.dot_dimension_numbers<[1], [0], [0], [1], [0, 0, 1, 1], [], []>} : vector<8x128xf32>, vector<128x128xf32>, vector<8x128xf32> -> vector<8x128xf32>
    %6 = arith.addf %2, %5 : vector<8x128xf32>
    %c0_8 = arith.constant 0 : index
    %c0_9 = arith.constant 0 : index
    %7 = vector.load %arg5[%c0_8, %c0_9] : memref<1x128xf32, #tpu.memory_space<vmem>>, vector<1x128xf32>
    %8 = vector.broadcast %7 : vector<1x128xf32> to vector<8x128xf32>
    %9 = arith.addf %6, %8 : vector<8x128xf32>
    %cst_10 = arith.constant dense<0xFF800000> : vector<8xf32>
    %10 = vector.multi_reduction <maximumf>, %9, %cst_10 [1] : vector<8x128xf32> to vector<8xf32>
    %11 = vector.shape_cast %10 : vector<8xf32> to vector<8x1xf32>
    %12 = vector.broadcast %11 : vector<8x1xf32> to vector<8x128xf32>
    %13 = arith.subf %9, %12 : vector<8x128xf32>
    %14 = math.exp %13 : vector<8x128xf32>
    %cst_11 = arith.constant dense<0.000000e+00> : vector<8xf32>
    %15 = vector.multi_reduction <add>, %14, %cst_11 [1] : vector<8x128xf32> to vector<8xf32>
    %16 = vector.shape_cast %15 : vector<8xf32> to vector<8x1xf32>
    %17 = math.log %16 : vector<8x1xf32>
    %18 = vector.broadcast %17 : vector<8x1xf32> to vector<8x128xf32>
    %19 = arith.subf %13, %18 : vector<8x128xf32>
    %20 = vector.extract_strided_slice %19 {offsets = [0, 0], sizes = [8, 2], strides = [1, 1]} : vector<8x128xf32> to vector<8x2xf32>
    %c0_12 = arith.constant 0 : index
    %c0_13 = arith.constant 0 : index
    %21 = vector.load %arg6[%c0_12, %c0_13] : memref<8x2xf32, #tpu.memory_space<vmem>>, vector<8x2xf32>
    tpu.vector_store %arg6[%c0_12, %c0_13], %20 {strides = array<i32>} : memref<8x2xf32, #tpu.memory_space<vmem>>, vector<8x2xf32>,
    return
  }
  func.func @transform_0(%arg0: i32) -> (i32, i32) {
    %c0_i32 = arith.constant 0 : i32
    %c0_i32_0 = arith.constant 0 : i32
    return %arg0, %c0_i32 : i32, i32
  }
  func.func @transform_1(%arg0: i32) -> (i32, i32) {
    %c0_i32 = arith.constant 0 : i32
    %c0_i32_0 = arith.constant 0 : i32
    return %arg0, %c0_i32 : i32, i32
  }
  func.func @transform_2(%arg0: i32) -> (i32, i32) {
    %c0_i32 = arith.constant 0 : i32
    %c0_i32_0 = arith.constant 0 : i32
    %c0_i32_1 = arith.constant 0 : i32
    return %c0_i32, %c0_i32_0 : i32, i32
  }
  func.func @transform_3(%arg0: i32) -> (i32, i32) {
    %c0_i32 = arith.constant 0 : i32
    %c0_i32_0 = arith.constant 0 : i32
    %c0_i32_1 = arith.constant 0 : i32
    return %c0_i32, %c0_i32_0 : i32, i32
  }
  func.func @transform_4(%arg0: i32) -> (i32, i32) {
    %c0_i32 = arith.constant 0 : i32
    %c0_i32_0 = arith.constant 0 : i32
    %c0_i32_1 = arith.constant 0 : i32
    return %c0_i32, %c0_i32_0 : i32, i32
  }
  func.func @transform_5(%arg0: i32) -> (i32, i32) {
    %c0_i32 = arith.constant 0 : i32
    %c0_i32_0 = arith.constant 0 : i32
    return %arg0, %c0_i32 : i32, i32
  }
}

module attributes {stable_mosaic.version = 11 : i64} {
  func.func @_linear_logsoftmax_kernel(%arg0: i32, %arg1: memref<8x128xf32, #tpu.memory_space<vmem>>, %arg2: memref<8x128xf32, #tpu.memory_space<vmem>>, %arg3: memref<128x128xf32, #tpu.memory_space<vmem>>, %arg4: memref<128x128xf32, #tpu.memory_space<vmem>>, %arg5: memref<1x128xf32, #tpu.memory_space<vmem>>, %arg6: memref<8x2xf32, #tpu.memory_space<vmem>>) attributes {dimension_semantics = [#tpu.dimension_semantics<parallel>], iteration_bounds = array<i64: 1>, scalar_prefetch = 0 : i64, scratch_operands = 0 : i64, tpu.core_type = #tpu.core_type<tc>, window_params = [{transform_indices = @transform_0, window_bounds = array<i64: 8, 128>}, {transform_indices = @transform_1, window_bounds = array<i64: 8, 128>}, {pipeline_mode = #tpu.pipeline_mode<synchronous>, transform_indices = @transform_2, window_bounds = array<i64: 128, 128>}, {pipeline_mode = #tpu.pipeline_mode<synchronous>, transform_indices = @transform_3, window_bounds = array<i64: 128, 128>}, {pipeline_mode = #tpu.pipeline_mode<synchronous>, transform_indices = @transform_4, window_bounds = array<i64: 1, 128>}, {transform_indices = @transform_5, window_bounds = array<i64: 8, 2>}]} {
    %c0 = arith.constant 0 : index
    %c0_0 = arith.constant 0 : index
    %0 = vector.load %arg1[%c0, %c0_0] : memref<8x128xf32, #tpu.memory_space<vmem>>, vector<8x128xf32>
    %c0_1 = arith.constant 0 : index
    %c0_2 = arith.constant 0 : index
    %1 = vector.load %arg3[%c0_1, %c0_2] : memref<128x128xf32, #tpu.memory_space<vmem>>, vector<128x128xf32>
    %cst = arith.constant dense<0.000000e+00> : vector<8x128xf32>
    %2 = tpu.matmul %0, %1, %cst {dimension_numbers = #tpu.dot_dimension_numbers<[1], [0], [0], [1], [0, 0, 1, 1], [], []>} : vector<8x128xf32>, vector<128x128xf32>, vector<8x128xf32> -> vector<8x128xf32>
    %c0_3 = arith.constant 0 : index
    %c0_4 = arith.constant 0 : index
    %3 = vector.load %arg2[%c0_3, %c0_4] : memref<8x128xf32, #tpu.memory_space<vmem>>, vector<8x128xf32>
    %c0_5 = arith.constant 0 : index
    %c0_6 = arith.constant 0 : index
    %4 = vector.load %arg4[%c0_5, %c0_6] : memref<128x128xf32, #tpu.memory_space<vmem>>, vector<128x128xf32>
    %cst_7 = arith.constant dense<0.000000e+00> : vector<8x128xf32>
    %5 = tpu.matmul %3, %4, %cst_7 {dimension_numbers = #tpu.dot_dimension_numbers<[1], [0], [0], [1], [0, 0, 1, 1], [], []>} : vector<8x128xf32>, vector<128x128xf32>, vector<8x128xf32> -> vector<8x128xf32>
    %6 = arith.addf %2, %5 : vector<8x128xf32>
    %c0_8 = arith.constant 0 : index
    %c0_9 = arith.constant 0 : index
    %7 = vector.load %arg5[%c0_8, %c0_9] : memref<1x128xf32, #tpu.memory_space<vmem>>, vector<1x128xf32>
    %8 = vector.broadcast %7 : vector<1x128xf32> to vector<8x128xf32>
    %9 = arith.addf %6, %8 : vector<8x128xf32>
    %cst_10 = arith.constant dense<0xFF800000> : vector<8xf32>
    %10 = vector.multi_reduction <maximumf>, %9, %cst_10 [1] : vector<8x128xf32> to vector<8xf32>
    %11 = vector.shape_cast %10 : vector<8xf32> to vector<8x1xf32>
    %12 = vector.broadcast %11 : vector<8x1xf32> to vector<8x128xf32>
    %13 = arith.subf %9, %12 : vector<8x128xf32>
    %14 = math.exp %13 : vector<8x128xf32>
    %cst_11 = arith.constant dense<0.000000e+00> : vector<8xf32>
    %15 = vector.multi_reduction <add>, %14, %cst_11 [1] : vector<8x128xf32> to vector<8xf32>
    %16 = vector.shape_cast %15 : vector<8xf32> to vector<8x1xf32>
    %17 = math.log %16 : vector<8x1xf32>
    %18 = vector.broadcast %17 : vector<8x1xf32> to vector<8x128xf32>
    %19 = arith.subf %13, %18 : vector<8x128xf32>
    %20 = vector.extract_strided_slice %19 {offsets = [0, 0], sizes = [8, 2], strides = [1, 1]} : vector<8x128xf32> to vector<8x2xf32>
    %c0_12 = arith.constant 0 : index
    %c0_13 = arith.constant 0 : index
    %21 = vector.load %arg6[%c0_12, %c0_13] : memref<8x2xf32, #tpu.memory_space<vmem>>, vector<8x2xf32>
    tpu.vector_store %arg6[%c0_12, %c0_13], %20 {strides = array<i32>} : memref<8x2xf32, #tpu.memory_space<vmem>>, vector<8x2xf32>,
    return
  }
  func.func @transform_0(%arg0: i32) -> (i32, i32) {
    %c0_i32 = arith.constant 0 : i32
    %c0_i32_0 = arith.constant 0 : i32
    return %arg0, %c0_i32 : i32, i32
  }
  func.func @transform_1(%arg0: i32) -> (i32, i32) {
    %c0_i32 = arith.constant 0 : i32
    %c0_i32_0 = arith.constant 0 : i32
    return %arg0, %c0_i32 : i32, i32
  }
  func.func @transform_2(%arg0: i32) -> (i32, i32) {
    %c0_i32 = arith.constant 0 : i32
    %c0_i32_0 = arith.constant 0 : i32
    %c0_i32_1 = arith.constant 0 : i32
    return %c0_i32, %c0_i32_0 : i32, i32
  }
  func.func @transform_3(%arg0: i32) -> (i32, i32) {
    %c0_i32 = arith.constant 0 : i32
    %c0_i32_0 = arith.constant 0 : i32
    %c0_i32_1 = arith.constant 0 : i32
    return %c0_i32, %c0_i32_0 : i32, i32
  }
  func.func @transform_4(%arg0: i32) -> (i32, i32) {
    %c0_i32 = arith.constant 0 : i32
    %c0_i32_0 = arith.constant 0 : i32
    %c0_i32_1 = arith.constant 0 : i32
    return %c0_i32, %c0_i32_0 : i32, i32
  }
  func.func @transform_5(%arg0: i32) -> (i32, i32) {
    %c0_i32 = arith.constant 0 : i32
    %c0_i32_0 = arith.constant 0 : i32
    return %arg0, %c0_i32 : i32, i32
  }
}

</mosaic_0001>

<llo_original>
// kernel: tpu_custom_call.1
$region0: #{tpu_custom_call.1}
  #allocation0 [shape = 'u32[]', space=smem, size = 0x4, offset = 0x4, fixed_abs, tag = 'smem constant byte address 0x4 - core index']
  #allocation1 [shape = 'u32[144,128]{1,0:T(1,128)}', space=vmem, size = 0x12000, scoped, tag = 'internal scratch']
  %s0 = inlined_call_operand.hbm [shape: f32[8,128], index: 0, kind: input, shape index: {}]
  %s1 = inlined_call_operand.hbm [shape: f32[8,128], index: 1, kind: input, shape index: {}]
  %s2 = inlined_call_operand.hbm [shape: f32[128,128], index: 2, kind: input, shape index: {}]
  %s3 = inlined_call_operand.hbm [shape: f32[128,128], index: 3, kind: input, shape index: {}]
  %s4 = inlined_call_operand.vmem [shape: f32[1,128], index: 4, kind: input, shape index: {}]
  %s5 = inlined_call_operand.vmem [shape: f32[8,2], index: 5, kind: output, shape index: {}]
  %s6 = sld [smem:[#allocation0]]
  $region46: #{tpu_custom_call.1} parent=0
    _
  %s8 = ssub.s32 1, %s6
  %s9 = scalar_select 0, %s8, %s6
  $region1: #{tpu_custom_call.1} parent=0
    #allocation2 [shape = 'u8[4096]{0}', space=vmem, size = 0x1000, scoped, tag = 'input window, operand 0, single buffered']
    #allocation3 [shape = 's32[1]{0}', space=sflag, size = 0x4, scoped, tag = 'scoped memory for tpu_custom_call.1']
    #allocation4 [shape = 'u8[4096]{0}', space=vmem, size = 0x1000, scoped, tag = 'input window, operand 1, single buffered']
    #allocation5 [shape = 's32[1]{0}', space=sflag, size = 0x4, scoped, tag = 'scoped memory for tpu_custom_call.1']
    #allocation6 [shape = 'u8[65536]{0}', space=vmem, size = 0x10000, scoped, tag = 'input window, operand 2, single buffered']
    #allocation7 [shape = 'u8[65536]{0}', space=vmem, size = 0x10000, scoped, tag = 'input window, operand 3, single buffered']
    #allocation8 [shape = 's32[1]{0}', space=sflag, size = 0x4, scoped, tag = 'scoped memory for tpu_custom_call.1']
    %10 = vsyncpa [#allocation3], 0
    %11 = vsyncpa [#allocation5], 0
    %12 = vsyncpa [#allocation8], 0
    // Predicated region
    $region2: #{tpu_custom_call.1} parent=1 // pred_check
      _
    $region3: #{tpu_custom_call.1} parent=1 // pred_check_branch
      %14 = sbr.rel (0) target = $region5
    $region4: #{tpu_custom_call.1} parent=1 // pred_region
      %s16 = ssub.s32 128, 128
      %17 = vsyncadd [#allocation3], %s16
      %s19 = sshll.u32 [#allocation2], 4
      %s20 = int_to_ptr.vmem [resolvable:$true] %s19
      %22 = dma.hbm_to_vmem [thread:$0]  %s0, 128, %s20, [#allocation3]
    $region5: #{tpu_custom_call.1} parent=1 // pred_fallthru
      _
    // Predicated region
    $region6: #{tpu_custom_call.1} parent=1 // pred_check
      _
    $region7: #{tpu_custom_call.1} parent=1 // pred_check_branch
      %24 = sbr.rel (0) target = $region9
    $region8: #{tpu_custom_call.1} parent=1 // pred_region
      %s26 = ssub.s32 128, 128
      %27 = vsyncadd [#allocation5], %s26
      %s29 = sshll.u32 [#allocation4], 4
      %s30 = int_to_ptr.vmem [resolvable:$true] %s29
      %32 = dma.hbm_to_vmem [thread:$0]  %s1, 128, %s30, [#allocation5]
    $region9: #{tpu_custom_call.1} parent=1 // pred_fallthru
      _
    // Predicated region
    $region10: #{tpu_custom_call.1} parent=1 // pred_check
      _
    $region11: #{tpu_custom_call.1} parent=1 // pred_check_branch
      %34 = sbr.rel (0) target = $region13
    $region12: #{tpu_custom_call.1} parent=1 // pred_region
      %s36 = ssub.s32 2048, 2048
      %37 = vsyncadd [#allocation5], %s36
      %s38 = sshll.u32 [#allocation6], 4
      %s39 = int_to_ptr.vmem [resolvable:$true] %s38
      %44 = dma.hbm_to_vmem [thread:$0]  %s2, 2048, %s39, [#allocation5], 128, 128, 8
    $region13: #{tpu_custom_call.1} parent=1 // pred_fallthru
      _
    // Predicated region
    $region14: #{tpu_custom_call.1} parent=1 // pred_check
      _
    $region15: #{tpu_custom_call.1} parent=1 // pred_check_branch
      %46 = sbr.rel (0) target = $region17
    $region16: #{tpu_custom_call.1} parent=1 // pred_region
      %s48 = ssub.s32 2048, 2048
      %49 = vsyncadd [#allocation8], %s48
      %s50 = sshll.u32 [#allocation7], 4
      %s51 = int_to_ptr.vmem [resolvable:$true] %s50
      %56 = dma.hbm_to_vmem [thread:$0]  %s3, 2048, %s51, [#allocation8], 128, 128, 8
    $region17: #{tpu_custom_call.1} parent=1 // pred_fallthru
      _
    // Predicated region
    $region18: #{tpu_custom_call.1} parent=1 // pred_check
      _
    $region19: #{tpu_custom_call.1} parent=1 // pred_check_branch
      %58 = sbr.rel (0) target = $region21
    $region20: #{tpu_custom_call.1} parent=1 // pred_region
      _
    $region21: #{tpu_custom_call.1} parent=1 // pred_fallthru
      _
    // Predicated region
    $region22: #{tpu_custom_call.1} parent=1 // pred_check
      _
    $region23: #{tpu_custom_call.1} parent=1 // pred_check_branch
      %60 = sbr.rel (0) target = $region25
    $region24: #{tpu_custom_call.1} parent=1 // pred_region
      %61 = dma.done [#allocation3], 128
    $region25: #{tpu_custom_call.1} parent=1 // pred_fallthru
      _
    // Predicated region
    $region26: #{tpu_custom_call.1} parent=1 // pred_check
      _
    $region27: #{tpu_custom_call.1} parent=1 // pred_check_branch
      %63 = sbr.rel (0) target = $region29
    $region28: #{tpu_custom_call.1} parent=1 // pred_region
      %64 = dma.done [#allocation5], 128
    $region29: #{tpu_custom_call.1} parent=1 // pred_fallthru
      _
    // Predicated region
    $region30: #{tpu_custom_call.1} parent=1 // pred_check
      _
    $region31: #{tpu_custom_call.1} parent=1 // pred_check_branch
      %66 = sbr.rel (0) target = $region33
    $region32: #{tpu_custom_call.1} parent=1 // pred_region
      %67 = dma.done [#allocation5], 2048
    $region33: #{tpu_custom_call.1} parent=1 // pred_fallthru
      _
    // Predicated region
    $region34: #{tpu_custom_call.1} parent=1 // pred_check
      _
    $region35: #{tpu_custom_call.1} parent=1 // pred_check_branch
      %69 = sbr.rel (0) target = $region37
    $region36: #{tpu_custom_call.1} parent=1 // pred_region
      %70 = dma.done [#allocation8], 2048
    $region37: #{tpu_custom_call.1} parent=1 // pred_fallthru
      _
    %v71 = vld [vmem:[#allocation2] sm:$0xff]
    %v72 = vld [vmem:[#allocation6] sm:$0xff]
    %v73 = vld [vmem:[#allocation6 + $0x8] sm:$0xff]
    %v74 = vld [vmem:[#allocation6 + $0x10] sm:$0xff]
    %v75 = vld [vmem:[#allocation6 + $0x18] sm:$0xff]
    %v76 = vld [vmem:[#allocation6 + $0x20] sm:$0xff]
    %v77 = vld [vmem:[#allocation6 + $0x28] sm:$0xff]
    %v78 = vld [vmem:[#allocation6 + $0x30] sm:$0xff]
    %v79 = vld [vmem:[#allocation6 + $0x38] sm:$0xff]
    %v80 = vld [vmem:[#allocation6 + $0x40] sm:$0xff]
    %v81 = vld [vmem:[#allocation6 + $0x48] sm:$0xff]
    %v82 = vld [vmem:[#allocation6 + $0x50] sm:$0xff]
    %v83 = vld [vmem:[#allocation6 + $0x58] sm:$0xff]
    %v84 = vld [vmem:[#allocation6 + $0x60] sm:$0xff]
    %v85 = vld [vmem:[#allocation6 + $0x68] sm:$0xff]
    %v86 = vld [vmem:[#allocation6 + $0x70] sm:$0xff]
    %v87 = vld [vmem:[#allocation6 + $0x78] sm:$0xff]
    %v88 = vld [vmem:[#allocation4] sm:$0xff]
    %v89 = vld [vmem:[#allocation7] sm:$0xff]
    %v90 = vld [vmem:[#allocation7 + $0x8] sm:$0xff]
    %v91 = vld [vmem:[#allocation7 + $0x10] sm:$0xff]
    %v92 = vld [vmem:[#allocation7 + $0x18] sm:$0xff]
    %v93 = vld [vmem:[#allocation7 + $0x20] sm:$0xff]
    %v94 = vld [vmem:[#allocation7 + $0x28] sm:$0xff]
    %v95 = vld [vmem:[#allocation7 + $0x30] sm:$0xff]
    %v96 = vld [vmem:[#allocation7 + $0x38] sm:$0xff]
    %v97 = vld [vmem:[#allocation7 + $0x40] sm:$0xff]
    %v98 = vld [vmem:[#allocation7 + $0x48] sm:$0xff]
    %v99 = vld [vmem:[#allocation7 + $0x50] sm:$0xff]
    %v100 = vld [vmem:[#allocation7 + $0x58] sm:$0xff]
    %v101 = vld [vmem:[#allocation7 + $0x60] sm:$0xff]
    %v102 = vld [vmem:[#allocation7 + $0x68] sm:$0xff]
    %v103 = vld [vmem:[#allocation7 + $0x70] sm:$0xff]
    %v104 = vld [vmem:[#allocation7 + $0x78] sm:$0xff]
    %105 = vmatprep.subr.mxu0 0.0
    %106 = vmatpush1.msra.mxu0 %v89
    %107 = vmatprep.subr.mxu0 0.0
    %108 = vmatpush1.msra.mxu0 %v90
    %109 = vmatprep.subr.mxu0 0.0
    %110 = vmatpush1.msra.mxu0 %v91
    %111 = vmatprep.subr.mxu0 0.0
    %112 = vmatpush1.msra.mxu0 %v92
    %113 = vmatprep.subr.mxu0 0.0
    %114 = vmatpush1.msra.mxu0 %v93
    %115 = vmatprep.subr.mxu0 0.0
    %116 = vmatpush1.msra.mxu0 %v94
    %117 = vmatprep.subr.mxu0 0.0
    %118 = vmatpush1.msra.mxu0 %v95
    %119 = vmatprep.subr.mxu0 0.0
    %120 = vmatpush1.msra.mxu0 %v96
    %121 = vmatprep.subr.mxu0 0.0
    %122 = vmatpush1.msra.mxu0 %v97
    %123 = vmatprep.subr.mxu0 0.0
    %124 = vmatpush1.msra.mxu0 %v98
    %125 = vmatprep.subr.mxu0 0.0
    %126 = vmatpush1.msra.mxu0 %v99
    %127 = vmatprep.subr.mxu0 0.0
    %128 = vmatpush1.msra.mxu0 %v100
    %129 = vmatprep.subr.mxu0 0.0
    %130 = vmatpush1.msra.mxu0 %v101
    %131 = vmatprep.subr.mxu0 0.0
    %132 = vmatpush1.msra.mxu0 %v102
    %133 = vmatprep.subr.mxu0 0.0
    %134 = vmatpush1.msra.mxu0 %v103
    %135 = vmatprep.subr.mxu0 0.0
    %136 = vmatpush1.msra.mxu0 %v104
    %137 = vmatprep.subr.mxu0 0.0
    %138 = vmatpush1.msra.mxu0 0.0
    %139 = vmatprep.subr.mxu0 0.0
    %140 = vmatpush1.msra.mxu0 0.0
    %141 = vmatprep.subr.mxu0 0.0
    %142 = vmatpush1.msra.mxu0 0.0
    %143 = vmatprep.subr.mxu0 0.0
    %144 = vmatpush1.msra.mxu0 0.0
    %145 = vmatprep.subr.mxu0 0.0
    %146 = vmatpush1.msra.mxu0 0.0
    %147 = vmatprep.subr.mxu0 0.0
    %148 = vmatpush1.msra.mxu0 0.0
    %149 = vmatprep.subr.mxu0 0.0
    %150 = vmatpush1.msra.mxu0 0.0
    %151 = vmatprep.subr.mxu0 0.0
    %152 = vmatpush1.msra.mxu0 0.0
    %153 = vmatprep.subr.mxu0 0.0
    %154 = vmatpush1.msra.mxu0 0.0
    %155 = vmatprep.subr.mxu0 0.0
    %156 = vmatpush1.msra.mxu0 0.0
    %157 = vmatprep.subr.mxu0 0.0
    %158 = vmatpush1.msra.mxu0 0.0
    %159 = vmatprep.subr.mxu0 0.0
    %160 = vmatpush1.msra.mxu0 0.0
    %161 = vmatprep.subr.mxu0 0.0
    %162 = vmatpush1.msra.mxu0 0.0
    %163 = vmatprep.subr.mxu0 0.0
    %164 = vmatpush1.msra.mxu0 0.0
    %165 = vmatprep.subr.mxu0 0.0
    %166 = vmatpush1.msra.mxu0 0.0
    %167 = vmatprep.subr.mxu0 0.0
    %168 = vmatpush1.msra.mxu0 0.0
    %169 = vmatprep.mubr.f32.mxu0 0.0
    %170 = vmatmul.mubr.f32.gmra.mrb[0].mxu0 %v88
    %v171 = vpop.f32.mrb[0].mxu0
    %v172 = vadd.f32 0.0, %v171
    %v173 = vpop.f32.mrb[0].mxu0
    %174 = vdwg.mxu0
    %175 = vmatprep.subr.mxu0 0.0
    %176 = vmatpush1.msra.mxu0 %v72
    %177 = vmatprep.subr.mxu0 0.0
    %178 = vmatpush1.msra.mxu0 %v73
    %179 = vmatprep.subr.mxu0 0.0
    %180 = vmatpush1.msra.mxu0 %v74
    %181 = vmatprep.subr.mxu0 0.0
    %182 = vmatpush1.msra.mxu0 %v75
    %183 = vmatprep.subr.mxu0 0.0
    %184 = vmatpush1.msra.mxu0 %v76
    %185 = vmatprep.subr.mxu0 0.0
    %186 = vmatpush1.msra.mxu0 %v77
    %187 = vmatprep.subr.mxu0 0.0
    %188 = vmatpush1.msra.mxu0 %v78
    %189 = vmatprep.subr.mxu0 0.0
    %190 = vmatpush1.msra.mxu0 %v79
    %191 = vmatprep.subr.mxu0 0.0
    %192 = vmatpush1.msra.mxu0 %v80
    %193 = vmatprep.subr.mxu0 0.0
    %194 = vmatpush1.msra.mxu0 %v81
    %195 = vmatprep.subr.mxu0 0.0
    %196 = vmatpush1.msra.mxu0 %v82
    %197 = vmatprep.subr.mxu0 0.0
    %198 = vmatpush1.msra.mxu0 %v83
    %199 = vmatprep.subr.mxu0 0.0
    %200 = vmatpush1.msra.mxu0 %v84
    %201 = vmatprep.subr.mxu0 0.0
    %202 = vmatpush1.msra.mxu0 %v85
    %203 = vmatprep.subr.mxu0 0.0
    %204 = vmatpush1.msra.mxu0 %v86
    %205 = vmatprep.subr.mxu0 0.0
    %206 = vmatpush1.msra.mxu0 %v87
    %207 = vmatprep.subr.mxu0 0.0
    %208 = vmatpush1.msra.mxu0 0.0
    %209 = vmatprep.subr.mxu0 0.0
    %210 = vmatpush1.msra.mxu0 0.0
    %211 = vmatprep.subr.mxu0 0.0
    %212 = vmatpush1.msra.mxu0 0.0
    %213 = vmatprep.subr.mxu0 0.0
    %214 = vmatpush1.msra.mxu0 0.0
    %215 = vmatprep.subr.mxu0 0.0
    %216 = vmatpush1.msra.mxu0 0.0
    %217 = vmatprep.subr.mxu0 0.0
    %218 = vmatpush1.msra.mxu0 0.0
    %219 = vmatprep.subr.mxu0 0.0
    %220 = vmatpush1.msra.mxu0 0.0
    %221 = vmatprep.subr.mxu0 0.0
    %222 = vmatpush1.msra.mxu0 0.0
    %223 = vmatprep.subr.mxu0 0.0
    %224 = vmatpush1.msra.mxu0 0.0
    %225 = vmatprep.subr.mxu0 0.0
    %226 = vmatpush1.msra.mxu0 0.0
    %227 = vmatprep.subr.mxu0 0.0
    %228 = vmatpush1.msra.mxu0 0.0
    %229 = vmatprep.subr.mxu0 0.0
    %230 = vmatpush1.msra.mxu0 0.0
    %231 = vmatprep.subr.mxu0 0.0
    %232 = vmatpush1.msra.mxu0 0.0
    %233 = vmatprep.subr.mxu0 0.0
    %234 = vmatpush1.msra.mxu0 0.0
    %235 = vmatprep.subr.mxu0 0.0
    %236 = vmatpush1.msra.mxu0 0.0
    %237 = vmatprep.subr.mxu0 0.0
    %238 = vmatpush1.msra.mxu0 0.0
    %239 = vmatprep.mubr.f32.mxu0 0.0
    %240 = vmatmul.mubr.f32.gmra.mrb[0].mxu0 %v71
    %v241 = vpop.f32.mrb[0].mxu0
    %v242 = vadd.f32 %v172, %v241
    %v243 = vpop.f32.mrb[0].mxu0
    %244 = vdwg.mxu0
    %v245 = vld [vmem:[%s4] sm:$0x1]
    %v247 = vlaneseq
    %v248 = vshrl.u32 %v247, 7
    %v249 = vsub.s32 0, %v248
    %v250 = vrot.slane %v245, %v249
    %v252 = vadd.f32 %v242, %v250
    %253 = vmax.xlane.f32.xlu0 %v252
    %v254 = vpop.xlane.xlu0 %253
    %v255 = vsub.f32 %v252, %v254
    %v256 = vmul.f32 %v255, 1.442695
    %v257 = vpow.pop %v256
    %258 = vadd.xlane.f32.xlu0 %v257
    %v259 = vpop.xlane.xlu0 %258
    %v260 = vlog2.pop %v259
    %v261 = vmul.f32 %v260, 0.6931472
    %v262 = vsub.f32 %v255, %v261
    %vm263 = vcmask 15360
    %264 = vst.msk [vmem:[%s5] sm:$0xff] %vm263, %v262
    // Predicated region
    $region38: #{tpu_custom_call.1} parent=1 // pred_check
      _
    $region39: #{tpu_custom_call.1} parent=1 // pred_check_branch
      %266 = sbr.rel (0) target = $region41
    $region40: #{tpu_custom_call.1} parent=1 // pred_region
      _
    $region41: #{tpu_custom_call.1} parent=1 // pred_fallthru
      _
    // Predicated region
    $region42: #{tpu_custom_call.1} parent=1 // pred_check
      _
    $region43: #{tpu_custom_call.1} parent=1 // pred_check_branch
      %268 = sbr.rel (0) target = $region45
    $region44: #{tpu_custom_call.1} parent=1 // pred_region
      _
    $region45: #{tpu_custom_call.1} parent=1 // pred_fallthru
      _
    %269 = vsyncpa [#allocation3], 1
    %270 = vsyncpa [#allocation5], 1
    %271 = vsyncpa [#allocation8], 1

// kernel: tpu_custom_call.1
$region0: #{tpu_custom_call.1}
  #allocation0 [shape = 'u32[]', space=smem, size = 0x4, offset = 0x4, fixed_abs, tag = 'smem constant byte address 0x4 - core index']
  #allocation1 [shape = 'u32[144,128]{1,0:T(1,128)}', space=vmem, size = 0x12000, scoped, tag = 'internal scratch']
  %s0 = inlined_call_operand.hbm [shape: f32[8,128], index: 0, kind: input, shape index: {}]
  %s1 = inlined_call_operand.hbm [shape: f32[8,128], index: 1, kind: input, shape index: {}]
  %s2 = inlined_call_operand.hbm [shape: f32[128,128], index: 2, kind: input, shape index: {}]
  %s3 = inlined_call_operand.hbm [shape: f32[128,128], index: 3, kind: input, shape index: {}]
  %s4 = inlined_call_operand.vmem [shape: f32[1,128], index: 4, kind: input, shape index: {}]
  %s5 = inlined_call_operand.vmem [shape: f32[8,2], index: 5, kind: output, shape index: {}]
  %s6 = sld [smem:[#allocation0]]
  $region46: #{tpu_custom_call.1} parent=0
    _
  %s8 = ssub.s32 1, %s6
  %s9 = scalar_select 0, %s8, %s6
  $region1: #{tpu_custom_call.1} parent=0
    #allocation2 [shape = 'u8[4096]{0}', space=vmem, size = 0x1000, scoped, tag = 'input window, operand 0, single buffered']
    #allocation3 [shape = 's32[1]{0}', space=sflag, size = 0x4, scoped, tag = 'scoped memory for tpu_custom_call.1']
    #allocation4 [shape = 'u8[4096]{0}', space=vmem, size = 0x1000, scoped, tag = 'input window, operand 1, single buffered']
    #allocation5 [shape = 's32[1]{0}', space=sflag, size = 0x4, scoped, tag = 'scoped memory for tpu_custom_call.1']
    #allocation6 [shape = 'u8[65536]{0}', space=vmem, size = 0x10000, scoped, tag = 'input window, operand 2, single buffered']
    #allocation7 [shape = 'u8[65536]{0}', space=vmem, size = 0x10000, scoped, tag = 'input window, operand 3, single buffered']
    #allocation8 [shape = 's32[1]{0}', space=sflag, size = 0x4, scoped, tag = 'scoped memory for tpu_custom_call.1']
    %10 = vsyncpa [#allocation3], 0
    %11 = vsyncpa [#allocation5], 0
    %12 = vsyncpa [#allocation8], 0
    // Predicated region
    $region2: #{tpu_custom_call.1} parent=1 // pred_check
      _
    $region3: #{tpu_custom_call.1} parent=1 // pred_check_branch
      %14 = sbr.rel (0) target = $region5
    $region4: #{tpu_custom_call.1} parent=1 // pred_region
      %s16 = ssub.s32 128, 128
      %17 = vsyncadd [#allocation3], %s16
      %s19 = sshll.u32 [#allocation2], 4
      %s20 = int_to_ptr.vmem [resolvable:$true] %s19
      %22 = dma.hbm_to_vmem [thread:$0]  %s0, 128, %s20, [#allocation3]
    $region5: #{tpu_custom_call.1} parent=1 // pred_fallthru
      _
    // Predicated region
    $region6: #{tpu_custom_call.1} parent=1 // pred_check
      _
    $region7: #{tpu_custom_call.1} parent=1 // pred_check_branch
      %24 = sbr.rel (0) target = $region9
    $region8: #{tpu_custom_call.1} parent=1 // pred_region
      %s26 = ssub.s32 128, 128
      %27 = vsyncadd [#allocation5], %s26
      %s29 = sshll.u32 [#allocation4], 4
      %s30 = int_to_ptr.vmem [resolvable:$true] %s29
      %32 = dma.hbm_to_vmem [thread:$0]  %s1, 128, %s30, [#allocation5]
    $region9: #{tpu_custom_call.1} parent=1 // pred_fallthru
      _
    // Predicated region
    $region10: #{tpu_custom_call.1} parent=1 // pred_check
      _
    $region11: #{tpu_custom_call.1} parent=1 // pred_check_branch
      %34 = sbr.rel (0) target = $region13
    $region12: #{tpu_custom_call.1} parent=1 // pred_region
      %s36 = ssub.s32 2048, 2048
      %37 = vsyncadd [#allocation5], %s36
      %s38 = sshll.u32 [#allocation6], 4
      %s39 = int_to_ptr.vmem [resolvable:$true] %s38
      %44 = dma.hbm_to_vmem [thread:$0]  %s2, 2048, %s39, [#allocation5], 128, 128, 8
    $region13: #{tpu_custom_call.1} parent=1 // pred_fallthru
      _
    // Predicated region
    $region14: #{tpu_custom_call.1} parent=1 // pred_check
      _
    $region15: #{tpu_custom_call.1} parent=1 // pred_check_branch
      %46 = sbr.rel (0) target = $region17
    $region16: #{tpu_custom_call.1} parent=1 // pred_region
      %s48 = ssub.s32 2048, 2048
      %49 = vsyncadd [#allocation8], %s48
      %s50 = sshll.u32 [#allocation7], 4
      %s51 = int_to_ptr.vmem [resolvable:$true] %s50
      %56 = dma.hbm_to_vmem [thread:$0]  %s3, 2048, %s51, [#allocation8], 128, 128, 8
    $region17: #{tpu_custom_call.1} parent=1 // pred_fallthru
      _
    // Predicated region
    $region18: #{tpu_custom_call.1} parent=1 // pred_check
      _
    $region19: #{tpu_custom_call.1} parent=1 // pred_check_branch
      %58 = sbr.rel (0) target = $region21
    $region20: #{tpu_custom_call.1} parent=1 // pred_region
      _
    $region21: #{tpu_custom_call.1} parent=1 // pred_fallthru
      _
    // Predicated region
    $region22: #{tpu_custom_call.1} parent=1 // pred_check
      _
    $region23: #{tpu_custom_call.1} parent=1 // pred_check_branch
      %60 = sbr.rel (0) target = $region25
    $region24: #{tpu_custom_call.1} parent=1 // pred_region
      %61 = dma.done [#allocation3], 128
    $region25: #{tpu_custom_call.1} parent=1 // pred_fallthru
      _
    // Predicated region
    $region26: #{tpu_custom_call.1} parent=1 // pred_check
      _
    $region27: #{tpu_custom_call.1} parent=1 // pred_check_branch
      %63 = sbr.rel (0) target = $region29
    $region28: #{tpu_custom_call.1} parent=1 // pred_region
      %64 = dma.done [#allocation5], 128
    $region29: #{tpu_custom_call.1} parent=1 // pred_fallthru
      _
    // Predicated region
    $region30: #{tpu_custom_call.1} parent=1 // pred_check
      _
    $region31: #{tpu_custom_call.1} parent=1 // pred_check_branch
      %66 = sbr.rel (0) target = $region33
    $region32: #{tpu_custom_call.1} parent=1 // pred_region
      %67 = dma.done [#allocation5], 2048
    $region33: #{tpu_custom_call.1} parent=1 // pred_fallthru
      _
    // Predicated region
    $region34: #{tpu_custom_call.1} parent=1 // pred_check
      _
    $region35: #{tpu_custom_call.1} parent=1 // pred_check_branch
      %69 = sbr.rel (0) target = $region37
    $region36: #{tpu_custom_call.1} parent=1 // pred_region
      %70 = dma.done [#allocation8], 2048
    $region37: #{tpu_custom_call.1} parent=1 // pred_fallthru
      _
    %v71 = vld [vmem:[#allocation2] sm:$0xff]
    %v72 = vld [vmem:[#allocation6] sm:$0xff]
    %v73 = vld [vmem:[#allocation6 + $0x8] sm:$0xff]
    %v74 = vld [vmem:[#allocation6 + $0x10] sm:$0xff]
    %v75 = vld [vmem:[#allocation6 + $0x18] sm:$0xff]
    %v76 = vld [vmem:[#allocation6 + $0x20] sm:$0xff]
    %v77 = vld [vmem:[#allocation6 + $0x28] sm:$0xff]
    %v78 = vld [vmem:[#allocation6 + $0x30] sm:$0xff]
    %v79 = vld [vmem:[#allocation6 + $0x38] sm:$0xff]
    %v80 = vld [vmem:[#allocation6 + $0x40] sm:$0xff]
    %v81 = vld [vmem:[#allocation6 + $0x48] sm:$0xff]
    %v82 = vld [vmem:[#allocation6 + $0x50] sm:$0xff]
    %v83 = vld [vmem:[#allocation6 + $0x58] sm:$0xff]
    %v84 = vld [vmem:[#allocation6 + $0x60] sm:$0xff]
    %v85 = vld [vmem:[#allocation6 + $0x68] sm:$0xff]
    %v86 = vld [vmem:[#allocation6 + $0x70] sm:$0xff]
    %v87 = vld [vmem:[#allocation6 + $0x78] sm:$0xff]
    %v88 = vld [vmem:[#allocation4] sm:$0xff]
    %v89 = vld [vmem:[#allocation7] sm:$0xff]
    %v90 = vld [vmem:[#allocation7 + $0x8] sm:$0xff]
    %v91 = vld [vmem:[#allocation7 + $0x10] sm:$0xff]
    %v92 = vld [vmem:[#allocation7 + $0x18] sm:$0xff]
    %v93 = vld [vmem:[#allocation7 + $0x20] sm:$0xff]
    %v94 = vld [vmem:[#allocation7 + $0x28] sm:$0xff]
    %v95 = vld [vmem:[#allocation7 + $0x30] sm:$0xff]
    %v96 = vld [vmem:[#allocation7 + $0x38] sm:$0xff]
    %v97 = vld [vmem:[#allocation7 + $0x40] sm:$0xff]
    %v98 = vld [vmem:[#allocation7 + $0x48] sm:$0xff]
    %v99 = vld [vmem:[#allocation7 + $0x50] sm:$0xff]
    %v100 = vld [vmem:[#allocation7 + $0x58] sm:$0xff]
    %v101 = vld [vmem:[#allocation7 + $0x60] sm:$0xff]
    %v102 = vld [vmem:[#allocation7 + $0x68] sm:$0xff]
    %v103 = vld [vmem:[#allocation7 + $0x70] sm:$0xff]
    %v104 = vld [vmem:[#allocation7 + $0x78] sm:$0xff]
    %105 = vmatprep.subr.mxu0 0.0
    %106 = vmatpush1.msra.mxu0 %v89
    %107 = vmatprep.subr.mxu0 0.0
    %108 = vmatpush1.msra.mxu0 %v90
    %109 = vmatprep.subr.mxu0 0.0
    %110 = vmatpush1.msra.mxu0 %v91
    %111 = vmatprep.subr.mxu0 0.0
    %112 = vmatpush1.msra.mxu0 %v92
    %113 = vmatprep.subr.mxu0 0.0
    %114 = vmatpush1.msra.mxu0 %v93
    %115 = vmatprep.subr.mxu0 0.0
    %116 = vmatpush1.msra.mxu0 %v94
    %117 = vmatprep.subr.mxu0 0.0
    %118 = vmatpush1.msra.mxu0 %v95
    %119 = vmatprep.subr.mxu0 0.0
    %120 = vmatpush1.msra.mxu0 %v96
    %121 = vmatprep.subr.mxu0 0.0
    %122 = vmatpush1.msra.mxu0 %v97
    %123 = vmatprep.subr.mxu0 0.0
    %124 = vmatpush1.msra.mxu0 %v98
    %125 = vmatprep.subr.mxu0 0.0
    %126 = vmatpush1.msra.mxu0 %v99
    %127 = vmatprep.subr.mxu0 0.0
    %128 = vmatpush1.msra.mxu0 %v100
    %129 = vmatprep.subr.mxu0 0.0
    %130 = vmatpush1.msra.mxu0 %v101
    %131 = vmatprep.subr.mxu0 0.0
    %132 = vmatpush1.msra.mxu0 %v102
    %133 = vmatprep.subr.mxu0 0.0
    %134 = vmatpush1.msra.mxu0 %v103
    %135 = vmatprep.subr.mxu0 0.0
    %136 = vmatpush1.msra.mxu0 %v104
    %137 = vmatprep.subr.mxu0 0.0
    %138 = vmatpush1.msra.mxu0 0.0
    %139 = vmatprep.subr.mxu0 0.0
    %140 = vmatpush1.msra.mxu0 0.0
    %141 = vmatprep.subr.mxu0 0.0
    %142 = vmatpush1.msra.mxu0 0.0
    %143 = vmatprep.subr.mxu0 0.0
    %144 = vmatpush1.msra.mxu0 0.0
    %145 = vmatprep.subr.mxu0 0.0
    %146 = vmatpush1.msra.mxu0 0.0
    %147 = vmatprep.subr.mxu0 0.0
    %148 = vmatpush1.msra.mxu0 0.0
    %149 = vmatprep.subr.mxu0 0.0
    %150 = vmatpush1.msra.mxu0 0.0
    %151 = vmatprep.subr.mxu0 0.0
    %152 = vmatpush1.msra.mxu0 0.0
    %153 = vmatprep.subr.mxu0 0.0
    %154 = vmatpush1.msra.mxu0 0.0
    %155 = vmatprep.subr.mxu0 0.0
    %156 = vmatpush1.msra.mxu0 0.0
    %157 = vmatprep.subr.mxu0 0.0
    %158 = vmatpush1.msra.mxu0 0.0
    %159 = vmatprep.subr.mxu0 0.0
    %160 = vmatpush1.msra.mxu0 0.0
    %161 = vmatprep.subr.mxu0 0.0
    %162 = vmatpush1.msra.mxu0 0.0
    %163 = vmatprep.subr.mxu0 0.0
    %164 = vmatpush1.msra.mxu0 0.0
    %165 = vmatprep.subr.mxu0 0.0
    %166 = vmatpush1.msra.mxu0 0.0
    %167 = vmatprep.subr.mxu0 0.0
    %168 = vmatpush1.msra.mxu0 0.0
    %169 = vmatprep.mubr.f32.mxu0 0.0
    %170 = vmatmul.mubr.f32.gmra.mrb[0].mxu0 %v88
    %v171 = vpop.f32.mrb[0].mxu0
    %v172 = vadd.f32 0.0, %v171
    %v173 = vpop.f32.mrb[0].mxu0
    %174 = vdwg.mxu0
    %175 = vmatprep.subr.mxu0 0.0
    %176 = vmatpush1.msra.mxu0 %v72
    %177 = vmatprep.subr.mxu0 0.0
    %178 = vmatpush1.msra.mxu0 %v73
    %179 = vmatprep.subr.mxu0 0.0
    %180 = vmatpush1.msra.mxu0 %v74
    %181 = vmatprep.subr.mxu0 0.0
    %182 = vmatpush1.msra.mxu0 %v75
    %183 = vmatprep.subr.mxu0 0.0
    %184 = vmatpush1.msra.mxu0 %v76
    %185 = vmatprep.subr.mxu0 0.0
    %186 = vmatpush1.msra.mxu0 %v77
    %187 = vmatprep.subr.mxu0 0.0
    %188 = vmatpush1.msra.mxu0 %v78
    %189 = vmatprep.subr.mxu0 0.0
    %190 = vmatpush1.msra.mxu0 %v79
    %191 = vmatprep.subr.mxu0 0.0
    %192 = vmatpush1.msra.mxu0 %v80
    %193 = vmatprep.subr.mxu0 0.0
    %194 = vmatpush1.msra.mxu0 %v81
    %195 = vmatprep.subr.mxu0 0.0
    %196 = vmatpush1.msra.mxu0 %v82
    %197 = vmatprep.subr.mxu0 0.0
    %198 = vmatpush1.msra.mxu0 %v83
    %199 = vmatprep.subr.mxu0 0.0
    %200 = vmatpush1.msra.mxu0 %v84
    %201 = vmatprep.subr.mxu0 0.0
    %202 = vmatpush1.msra.mxu0 %v85
    %203 = vmatprep.subr.mxu0 0.0
    %204 = vmatpush1.msra.mxu0 %v86
    %205 = vmatprep.subr.mxu0 0.0
    %206 = vmatpush1.msra.mxu0 %v87
    %207 = vmatprep.subr.mxu0 0.0
    %208 = vmatpush1.msra.mxu0 0.0
    %209 = vmatprep.subr.mxu0 0.0
    %210 = vmatpush1.msra.mxu0 0.0
    %211 = vmatprep.subr.mxu0 0.0
    %212 = vmatpush1.msra.mxu0 0.0
    %213 = vmatprep.subr.mxu0 0.0
    %214 = vmatpush1.msra.mxu0 0.0
    %215 = vmatprep.subr.mxu0 0.0
    %216 = vmatpush1.msra.mxu0 0.0
    %217 = vmatprep.subr.mxu0 0.0
    %218 = vmatpush1.msra.mxu0 0.0
    %219 = vmatprep.subr.mxu0 0.0
    %220 = vmatpush1.msra.mxu0 0.0
    %221 = vmatprep.subr.mxu0 0.0
    %222 = vmatpush1.msra.mxu0 0.0
    %223 = vmatprep.subr.mxu0 0.0
    %224 = vmatpush1.msra.mxu0 0.0
    %225 = vmatprep.subr.mxu0 0.0
    %226 = vmatpush1.msra.mxu0 0.0
    %227 = vmatprep.subr.mxu0 0.0
    %228 = vmatpush1.msra.mxu0 0.0
    %229 = vmatprep.subr.mxu0 0.0
    %230 = vmatpush1.msra.mxu0 0.0
    %231 = vmatprep.subr.mxu0 0.0
    %232 = vmatpush1.msra.mxu0 0.0
    %233 = vmatprep.subr.mxu0 0.0
    %234 = vmatpush1.msra.mxu0 0.0
    %235 = vmatprep.subr.mxu0 0.0
    %236 = vmatpush1.msra.mxu0 0.0
    %237 = vmatprep.subr.mxu0 0.0
    %238 = vmatpush1.msra.mxu0 0.0
    %239 = vmatprep.mubr.f32.mxu0 0.0
    %240 = vmatmul.mubr.f32.gmra.mrb[0].mxu0 %v71
    %v241 = vpop.f32.mrb[0].mxu0
    %v242 = vadd.f32 %v172, %v241
    %v243 = vpop.f32.mrb[0].mxu0
    %244 = vdwg.mxu0
    %v245 = vld [vmem:[%s4] sm:$0x1]
    %v247 = vlaneseq
    %v248 = vshrl.u32 %v247, 7
    %v249 = vsub.s32 0, %v248
    %v250 = vrot.slane %v245, %v249
    %v252 = vadd.f32 %v242, %v250
    %253 = vmax.xlane.f32.xlu0 %v252
    %v254 = vpop.xlane.xlu0 %253
    %v255 = vsub.f32 %v252, %v254
    %v256 = vmul.f32 %v255, 1.442695
    %v257 = vpow.pop %v256
    %258 = vadd.xlane.f32.xlu0 %v257
    %v259 = vpop.xlane.xlu0 %258
    %v260 = vlog2.pop %v259
    %v261 = vmul.f32 %v260, 0.6931472
    %v262 = vsub.f32 %v255, %v261
    %vm263 = vcmask 15360
    %264 = vst.msk [vmem:[%s5] sm:$0xff] %vm263, %v262
    // Predicated region
    $region38: #{tpu_custom_call.1} parent=1 // pred_check
      _
    $region39: #{tpu_custom_call.1} parent=1 // pred_check_branch
      %266 = sbr.rel (0) target = $region41
    $region40: #{tpu_custom_call.1} parent=1 // pred_region
      _
    $region41: #{tpu_custom_call.1} parent=1 // pred_fallthru
      _
    // Predicated region
    $region42: #{tpu_custom_call.1} parent=1 // pred_check
      _
    $region43: #{tpu_custom_call.1} parent=1 // pred_check_branch
      %268 = sbr.rel (0) target = $region45
    $region44: #{tpu_custom_call.1} parent=1 // pred_region
      _
    $region45: #{tpu_custom_call.1} parent=1 // pred_fallthru
      _
    %269 = vsyncpa [#allocation3], 1
    %270 = vsyncpa [#allocation5], 1
    %271 = vsyncpa [#allocation8], 1

</llo_original>
